<compile_context>
chip_gen: v6e
topology: v6e:2x2x1
jax: 0.10.0
libtpu: 0.0.40
codegen_flags: <defaults>
</compile_context>

<pallas_src>
import jax
import jax.numpy as jnp
from jax.experimental import pallas as pl
from jax.experimental.pallas import tpu as pltpu

NEG_SLOPE = 0.01  # PyTorch nn.LeakyReLU default


def _round_up(x, m):
    return ((x + m - 1) // m) * m


def _leaky_relu(x):
    return jnp.where(x > 0, x, NEG_SLOPE * x)


def affine_net_kernel(w_ref, wm_ref, bm_ref, ws_ref, bs_ref, mean_ref, std_ref):
    # Both heads share the same activation tile; weights/biases stay
    # VMEM-resident across grid steps (same block index every step).
    x = w_ref[...]
    mean = jnp.dot(x, wm_ref[...], preferred_element_type=jnp.float32) + bm_ref[...]
    std = jnp.dot(x, ws_ref[...], preferred_element_type=jnp.float32) + bs_ref[...]
    mean_ref[...] = _leaky_relu(mean).astype(mean_ref.dtype)
    std_ref[...] = _leaky_relu(std).astype(std_ref.dtype)


def _affine_net_xla(w, w_mean, b_mean, w_std, b_std):
    # Plain-XLA path: at tiny batches the fixed pallas_call overhead dominates
    # and a fused XLA dot matches/beats the kernel.
    bm = jnp.reshape(b_mean, (1, -1))
    bs = jnp.reshape(b_std, (1, -1))
    return _leaky_relu(w @ w_mean + bm), _leaky_relu(w @ w_std + bs)


def _pick_tile(batch, tile_b):
    """Batch tile: multiple of 8 (f32 sublanes), >=2 grid steps when B is big."""
    tile_b = max(8, _round_up(tile_b, 8))
    if batch <= tile_b:
        # Split a single large tile in two so v7x's second TensorCore gets
        # work (each core still sees >=1024 rows); neutral on v5e/v6e.
        n_steps = 2 if batch >= 2048 else 1
    else:
        n_steps = -(-batch // tile_b)
    return _round_up(-(-batch // n_steps), 8)


def affine_net(w, w_mean, b_mean, w_std, b_std, *, tile_b=2048,
               out_dtype=jnp.float32, xla_fallback_batch=0):
    """AffineNet forward.

    Args:
      w:       (B, w_dim) style vectors, f32.
      w_mean:  (w_dim, out_size) mean-path weight (PyTorch weight.T).
      b_mean:  (out_size,) or (1, out_size) mean-path bias.
      w_std:   (w_dim, out_size) std-path weight (PyTorch weight.T).
      b_std:   (out_size,) or (1, out_size) std-path bias.
      tile_b:  batch rows per grid step (rounded up to a multiple of 8).
      out_dtype: output dtype; pass jnp.bfloat16 to halve output writeback
        traffic if downstream tolerates it (epilogue stays f32 either way).
      xla_fallback_batch: if B <= this, skip Pallas and use plain XLA
        (recommended ~256 in production; 0 keeps the kernel path always on).

    Returns:
      (mean, std): two (B, out_size) arrays of `out_dtype`.
    """
    B, w_dim = w.shape
    out_size = w_mean.shape[1]

    if B <= xla_fallback_batch:
        m, s = _affine_net_xla(w, w_mean, b_mean, w_std, b_std)
        return m.astype(out_dtype), s.astype(out_dtype)

    bm = jnp.reshape(b_mean, (1, out_size)).astype(jnp.float32)
    bs = jnp.reshape(b_std, (1, out_size)).astype(jnp.float32)

    tb = _pick_tile(B, tile_b)
    grid = (pl.cdiv(B, tb),)  # ragged last block is masked by Pallas

    mean, std = pl.pallas_call(
        affine_net_kernel,
        out_shape=(
            jax.ShapeDtypeStruct((B, out_size), out_dtype),
            jax.ShapeDtypeStruct((B, out_size), out_dtype),
        ),
        grid=grid,
        in_specs=[
            # Batch-tiled activations (f32 straight from HBM, no wrapper cast).
            pl.BlockSpec((tb, w_dim), lambda i: (i, 0)),
            # Weights / biases: same block every step -> VMEM-resident.
            pl.BlockSpec((w_dim, out_size), lambda i: (0, 0)),
            pl.BlockSpec((1, out_size), lambda i: (0, 0)),
            pl.BlockSpec((w_dim, out_size), lambda i: (0, 0)),
            pl.BlockSpec((1, out_size), lambda i: (0, 0)),
        ],
        out_specs=(
            pl.BlockSpec((tb, out_size), lambda i: (i, 0)),
            pl.BlockSpec((tb, out_size), lambda i: (i, 0)),
        ),
        compiler_params=pltpu.CompilerParams(
            # Batch steps are independent -> shard across v7x's 2 TensorCores.
            dimension_semantics=("parallel",),
        ),
    )(w.astype(jnp.float32), w_mean.astype(jnp.float32), bm,
      w_std.astype(jnp.float32), bs)

    return mean, std


def init_params(key, w_dim, out_size):
    """Deterministic init mimicking nn.Linear's uniform(-1/sqrt(in), 1/sqrt(in))."""
    k1, k2, k3, k4 = jax.random.split(key, 4)
    bound = 1.0 / jnp.sqrt(jnp.float32(w_dim))
    # Stored pre-transposed: (w_dim, out_size) == PyTorch weight.T
    w_mean = jax.random.uniform(k1, (w_dim, out_size), jnp.float32, -bound, bound)
    b_mean = jax.random.uniform(k2, (1, out_size), jnp.float32, -bound, bound)
    w_std = jax.random.uniform(k3, (w_dim, out_size), jnp.float32, -bound, bound)
    b_std = jax.random.uniform(k4, (1, out_size), jnp.float32, -bound, bound)
    return w_mean, b_mean, w_std, b_std


if __name__ == "__main__":
    key = jax.random.PRNGKey(0)
    k_in, k_par = jax.random.split(key)

    batch, w_dim, out_size = 8, 32, 64
    w = jax.random.normal(k_in, (batch, w_dim), jnp.float32)
    w_mean, b_mean, w_std, b_std = init_params(k_par, w_dim, out_size)

    mean, std = affine_net(w, w_mean, b_mean, w_std, b_std)
    mean = jax.block_until_ready(mean)
    std = jax.block_until_ready(std)

    # Pure-JAX reference (f32 end to end, matching PyTorch semantics).
    ref_mean, ref_std = _affine_net_xla(w, w_mean, b_mean, w_std, b_std)

    assert mean.shape == (batch, out_size) and std.shape == (batch, out_size)
    assert jnp.allclose(mean, ref_mean, atol=2e-3, rtol=2e-3)
    assert jnp.allclose(std, ref_std, atol=2e-3, rtol=2e-3)

    print("KERNEL_OK")
</pallas_src>

<mosaic_0001>
module attributes {stable_mosaic.version = 11 : i64} {
  func.func @affine_net_kernel(%arg0: i32, %arg1: memref<8x32xf32, #tpu.memory_space<vmem>>, %arg2: memref<32x64xf32, #tpu.memory_space<vmem>>, %arg3: memref<1x64xf32, #tpu.memory_space<vmem>>, %arg4: memref<32x64xf32, #tpu.memory_space<vmem>>, %arg5: memref<1x64xf32, #tpu.memory_space<vmem>>, %arg6: memref<8x64xf32, #tpu.memory_space<vmem>>, %arg7: memref<8x64xf32, #tpu.memory_space<vmem>>) attributes {dimension_semantics = [#tpu.dimension_semantics<parallel>], iteration_bounds = array<i64: 1>, scalar_prefetch = 0 : i64, scratch_operands = 0 : i64, tpu.core_type = #tpu.core_type<tc>, window_params = [{transform_indices = @transform_0, window_bounds = array<i64: 8, 32>}, {pipeline_mode = #tpu.pipeline_mode<synchronous>, transform_indices = @transform_1, window_bounds = array<i64: 32, 64>}, {pipeline_mode = #tpu.pipeline_mode<synchronous>, transform_indices = @transform_2, window_bounds = array<i64: 1, 64>}, {pipeline_mode = #tpu.pipeline_mode<synchronous>, transform_indices = @transform_3, window_bounds = array<i64: 32, 64>}, {pipeline_mode = #tpu.pipeline_mode<synchronous>, transform_indices = @transform_4, window_bounds = array<i64: 1, 64>}, {transform_indices = @transform_5, window_bounds = array<i64: 8, 64>}, {transform_indices = @transform_6, window_bounds = array<i64: 8, 64>}]} {
    %c0 = arith.constant 0 : index
    %c0_0 = arith.constant 0 : index
    %0 = vector.load %arg1[%c0, %c0_0] : memref<8x32xf32, #tpu.memory_space<vmem>>, vector<8x32xf32>
    %c0_1 = arith.constant 0 : index
    %c0_2 = arith.constant 0 : index
    %1 = vector.load %arg2[%c0_1, %c0_2] : memref<32x64xf32, #tpu.memory_space<vmem>>, vector<32x64xf32>
    %cst = arith.constant dense<0.000000e+00> : vector<8x64xf32>
    %2 = tpu.matmul %0, %1, %cst {dimension_numbers = #tpu.dot_dimension_numbers<[1], [0], [0], [1], [0, 0, 1, 1], [], []>} : vector<8x32xf32>, vector<32x64xf32>, vector<8x64xf32> -> vector<8x64xf32>
    %c0_3 = arith.constant 0 : index
    %c0_4 = arith.constant 0 : index
    %3 = vector.load %arg3[%c0_3, %c0_4] : memref<1x64xf32, #tpu.memory_space<vmem>>, vector<1x64xf32>
    %4 = vector.broadcast %3 : vector<1x64xf32> to vector<8x64xf32>
    %5 = arith.addf %2, %4 : vector<8x64xf32>
    %c0_5 = arith.constant 0 : index
    %c0_6 = arith.constant 0 : index
    %6 = vector.load %arg4[%c0_5, %c0_6] : memref<32x64xf32, #tpu.memory_space<vmem>>, vector<32x64xf32>
    %cst_7 = arith.constant dense<0.000000e+00> : vector<8x64xf32>
    %7 = tpu.matmul %0, %6, %cst_7 {dimension_numbers = #tpu.dot_dimension_numbers<[1], [0], [0], [1], [0, 0, 1, 1], [], []>} : vector<8x32xf32>, vector<32x64xf32>, vector<8x64xf32> -> vector<8x64xf32>
    %c0_8 = arith.constant 0 : index
    %c0_9 = arith.constant 0 : index
    %8 = vector.load %arg5[%c0_8, %c0_9] : memref<1x64xf32, #tpu.memory_space<vmem>>, vector<1x64xf32>
    %9 = vector.broadcast %8 : vector<1x64xf32> to vector<8x64xf32>
    %10 = arith.addf %7, %9 : vector<8x64xf32>
    %cst_10 = arith.constant 0.000000e+00 : f32
    %11 = vector.broadcast %cst_10 : f32 to vector<8x64xf32>
    %12 = arith.cmpf ogt, %5, %11 : vector<8x64xf32>
    %cst_11 = arith.constant 0.00999999977 : f32
    %13 = vector.broadcast %cst_11 : f32 to vector<8x64xf32>
    %14 = arith.mulf %13, %5 : vector<8x64xf32>
    %15 = arith.select %12, %5, %14 : vector<8x64xi1>, vector<8x64xf32>
    %c0_12 = arith.constant 0 : index
    %c0_13 = arith.constant 0 : index
    %16 = vector.load %arg6[%c0_12, %c0_13] : memref<8x64xf32, #tpu.memory_space<vmem>>, vector<8x64xf32>
    tpu.vector_store %arg6[%c0_12, %c0_13], %15 {strides = array<i32>} : memref<8x64xf32, #tpu.memory_space<vmem>>, vector<8x64xf32>,
    %cst_14 = arith.constant 0.000000e+00 : f32
    %17 = vector.broadcast %cst_14 : f32 to vector<8x64xf32>
    %18 = arith.cmpf ogt, %10, %17 : vector<8x64xf32>
    %cst_15 = arith.constant 0.00999999977 : f32
    %19 = vector.broadcast %cst_15 : f32 to vector<8x64xf32>
    %20 = arith.mulf %19, %10 : vector<8x64xf32>
    %21 = arith.select %18, %10, %20 : vector<8x64xi1>, vector<8x64xf32>
    %c0_16 = arith.constant 0 : index
    %c0_17 = arith.constant 0 : index
    %22 = vector.load %arg7[%c0_16, %c0_17] : memref<8x64xf32, #tpu.memory_space<vmem>>, vector<8x64xf32>
    tpu.vector_store %arg7[%c0_16, %c0_17], %21 {strides = array<i32>} : memref<8x64xf32, #tpu.memory_space<vmem>>, vector<8x64xf32>,
    return
  }
  func.func @transform_0(%arg0: i32) -> (i32, i32) {
    %c0_i32 = arith.constant 0 : i32
    %c0_i32_0 = arith.constant 0 : i32
    return %arg0, %c0_i32 : i32, i32
  }
  func.func @transform_1(%arg0: i32) -> (i32, i32) {
    %c0_i32 = arith.constant 0 : i32
    %c0_i32_0 = arith.constant 0 : i32
    %c0_i32_1 = arith.constant 0 : i32
    return %c0_i32, %c0_i32_0 : i32, i32
  }
  func.func @transform_2(%arg0: i32) -> (i32, i32) {
    %c0_i32 = arith.constant 0 : i32
    %c0_i32_0 = arith.constant 0 : i32
    %c0_i32_1 = arith.constant 0 : i32
    return %c0_i32, %c0_i32_0 : i32, i32
  }
  func.func @transform_3(%arg0: i32) -> (i32, i32) {
    %c0_i32 = arith.constant 0 : i32
    %c0_i32_0 = arith.constant 0 : i32
    %c0_i32_1 = arith.constant 0 : i32
    return %c0_i32, %c0_i32_0 : i32, i32
  }
  func.func @transform_4(%arg0: i32) -> (i32, i32) {
    %c0_i32 = arith.constant 0 : i32
    %c0_i32_0 = arith.constant 0 : i32
    %c0_i32_1 = arith.constant 0 : i32
    return %c0_i32, %c0_i32_0 : i32, i32
  }
  func.func @transform_5(%arg0: i32) -> (i32, i32) {
    %c0_i32 = arith.constant 0 : i32
    %c0_i32_0 = arith.constant 0 : i32
    return %arg0, %c0_i32 : i32, i32
  }
  func.func @transform_6(%arg0: i32) -> (i32, i32) {
    %c0_i32 = arith.constant 0 : i32
    %c0_i32_0 = arith.constant 0 : i32
    return %arg0, %c0_i32 : i32, i32
  }
}

</mosaic_0001>

<llo_original>
// kernel: tpu_custom_call.1
$region0: #{tpu_custom_call.1}
  #allocation0 [shape = 'u32[]', space=smem, size = 0x4, offset = 0x4, fixed_abs, tag = 'smem constant byte address 0x4 - core index']
  #allocation1 [shape = 'u32[144,128]{1,0:T(1,128)}', space=vmem, size = 0x12000, scoped, tag = 'internal scratch']
  %s0 = inlined_call_operand.hbm [shape: f32[8,32], index: 0, kind: input, shape index: {}]
  %s1 = inlined_call_operand.hbm [shape: f32[32,64], index: 1, kind: input, shape index: {}]
  %s2 = inlined_call_operand.vmem [shape: f32[1,64], index: 2, kind: input, shape index: {}]
  %s3 = inlined_call_operand.hbm [shape: f32[32,64], index: 3, kind: input, shape index: {}]
  %s4 = inlined_call_operand.vmem [shape: f32[1,64], index: 4, kind: input, shape index: {}]
  %s5 = inlined_call_operand.hbm [shape: f32[8,64], index: 5, kind: output, shape index: {0}]
  %s6 = inlined_call_operand.hbm [shape: f32[8,64], index: 6, kind: output, shape index: {1}]
  %7 = xla_tuple %s5, %s6
  %s8 = sld [smem:[#allocation0]]
  $region50: #{tpu_custom_call.1} parent=0
    _
  %s10 = ssub.s32 1, %s8
  %s11 = scalar_select 0, %s10, %s8
  $region1: #{tpu_custom_call.1} parent=0
    #allocation2 [shape = 'u8[4096]{0}', space=vmem, size = 0x1000, scoped, tag = 'input window, operand 0, single buffered']
    #allocation3 [shape = 's32[1]{0}', space=sflag, size = 0x4, scoped, tag = 'scoped memory for tpu_custom_call.1']
    #allocation4 [shape = 's32[1]{0}', space=sflag, size = 0x4, scoped, tag = 'scoped memory for tpu_custom_call.1']
    #allocation5 [shape = 'u8[16384]{0}', space=vmem, size = 0x4000, scoped, tag = 'input window, operand 1, single buffered']
    #allocation6 [shape = 's32[1]{0}', space=sflag, size = 0x4, scoped, tag = 'scoped memory for tpu_custom_call.1']
    #allocation7 [shape = 'u8[16384]{0}', space=vmem, size = 0x4000, scoped, tag = 'input window, operand 3, single buffered']
    #allocation8 [shape = 'u8[4096]{0}', space=vmem, size = 0x1000, scoped, tag = 'output window, operand 0, single buffered']
    #allocation9 [shape = 'u8[4096]{0}', space=vmem, size = 0x1000, scoped, tag = 'output window, operand 1, single buffered']
    #allocation10 [shape = 's32[1]{0}', space=sflag, size = 0x4, scoped, tag = 'scoped memory for tpu_custom_call.1']
    %12 = vsyncpa [#allocation3], 0
    %13 = vsyncpa [#allocation6], 0
    %14 = vsyncpa [#allocation4], 0
    %15 = vsyncpa [#allocation10], 0
    // Predicated region
    $region2: #{tpu_custom_call.1} parent=1 // pred_check
      _
    $region3: #{tpu_custom_call.1} parent=1 // pred_check_branch
      %17 = sbr.rel (0) target = $region5
    $region4: #{tpu_custom_call.1} parent=1 // pred_region
      %s19 = ssub.s32 128, 128
      %20 = vsyncadd [#allocation3], %s19
      %s22 = sshll.u32 [#allocation2], 4
      %s23 = int_to_ptr.vmem [resolvable:$true] %s22
      %25 = dma.hbm_to_vmem [thread:$0]  %s0, 128, %s23, [#allocation3]
    $region5: #{tpu_custom_call.1} parent=1 // pred_fallthru
      _
    // Predicated region
    $region6: #{tpu_custom_call.1} parent=1 // pred_check
      _
    $region7: #{tpu_custom_call.1} parent=1 // pred_check_branch
      %27 = sbr.rel (0) target = $region9
    $region8: #{tpu_custom_call.1} parent=1 // pred_region
      %s29 = ssub.s32 512, 512
      %30 = vsyncadd [#allocation6], %s29
      %s31 = sshll.u32 [#allocation5], 4
      %s32 = int_to_ptr.vmem [resolvable:$true] %s31
      %37 = dma.hbm_to_vmem [thread:$0]  %s1, 512, %s32, [#allocation6], 128, 128, 8
    $region9: #{tpu_custom_call.1} parent=1 // pred_fallthru
      _
    // Predicated region
    $region10: #{tpu_custom_call.1} parent=1 // pred_check
      _
    $region11: #{tpu_custom_call.1} parent=1 // pred_check_branch
      %39 = sbr.rel (0) target = $region13
    $region12: #{tpu_custom_call.1} parent=1 // pred_region
      _
    $region13: #{tpu_custom_call.1} parent=1 // pred_fallthru
      _
    // Predicated region
    $region14: #{tpu_custom_call.1} parent=1 // pred_check
      _
    $region15: #{tpu_custom_call.1} parent=1 // pred_check_branch
      %41 = sbr.rel (0) target = $region17
    $region16: #{tpu_custom_call.1} parent=1 // pred_region
      %s43 = ssub.s32 512, 512
      %44 = vsyncadd [#allocation6], %s43
      %s45 = sshll.u32 [#allocation7], 4
      %s46 = int_to_ptr.vmem [resolvable:$true] %s45
      %51 = dma.hbm_to_vmem [thread:$0]  %s3, 512, %s46, [#allocation6], 128, 128, 8
    $region17: #{tpu_custom_call.1} parent=1 // pred_fallthru
      _
    // Predicated region
    $region18: #{tpu_custom_call.1} parent=1 // pred_check
      _
    $region19: #{tpu_custom_call.1} parent=1 // pred_check_branch
      %53 = sbr.rel (0) target = $region21
    $region20: #{tpu_custom_call.1} parent=1 // pred_region
      _
    $region21: #{tpu_custom_call.1} parent=1 // pred_fallthru
      _
    // Predicated region
    $region22: #{tpu_custom_call.1} parent=1 // pred_check
      _
    $region23: #{tpu_custom_call.1} parent=1 // pred_check_branch
      %55 = sbr.rel (0) target = $region25
    $region24: #{tpu_custom_call.1} parent=1 // pred_region
      %56 = dma.done [#allocation3], 128
    $region25: #{tpu_custom_call.1} parent=1 // pred_fallthru
      _
    // Predicated region
    $region26: #{tpu_custom_call.1} parent=1 // pred_check
      _
    $region27: #{tpu_custom_call.1} parent=1 // pred_check_branch
      %58 = sbr.rel (0) target = $region29
    $region28: #{tpu_custom_call.1} parent=1 // pred_region
      %59 = dma.done [#allocation6], 512
    $region29: #{tpu_custom_call.1} parent=1 // pred_fallthru
      _
    // Predicated region
    $region30: #{tpu_custom_call.1} parent=1 // pred_check
      _
    $region31: #{tpu_custom_call.1} parent=1 // pred_check_branch
      %61 = sbr.rel (0) target = $region33
    $region32: #{tpu_custom_call.1} parent=1 // pred_region
      %62 = dma.done [#allocation6], 512
    $region33: #{tpu_custom_call.1} parent=1 // pred_fallthru
      _
    %v63 = vld [vmem:[#allocation2] sm:$0xff]
    %v64 = vld [vmem:[#allocation5] sm:$0xff]
    %v65 = vld [vmem:[#allocation5 + $0x8] sm:$0xff]
    %v66 = vld [vmem:[#allocation5 + $0x10] sm:$0xff]
    %v67 = vld [vmem:[#allocation5 + $0x18] sm:$0xff]
    %v68 = vld [vmem:[%s2] sm:$0x1]
    %v70 = vlaneseq
    %v71 = vshrl.u32 %v70, 7
    %v72 = vsub.s32 0, %v71
    %v73 = vrot.slane %v68, %v72
    %vm75 = vcmask 261120
    %v77 = vsel %vm75, %v63, 0
    %79 = vmatprep.subr.mxu0 0.0
    %80 = vmatpush1.msra.mxu0 0.0
    %81 = vmatprep.subr.mxu0 0.0
    %82 = vmatpush1.msra.mxu0 0.0
    %83 = vmatprep.subr.mxu0 0.0
    %84 = vmatpush1.msra.mxu0 0.0
    %85 = vmatprep.subr.mxu0 0.0
    %86 = vmatpush1.msra.mxu0 0.0
    %87 = vmatprep.subr.mxu0 0.0
    %88 = vmatpush1.msra.mxu0 0.0
    %89 = vmatprep.subr.mxu0 0.0
    %90 = vmatpush1.msra.mxu0 0.0
    %91 = vmatprep.subr.mxu0 0.0
    %92 = vmatpush1.msra.mxu0 0.0
    %93 = vmatprep.subr.mxu0 0.0
    %94 = vmatpush1.msra.mxu0 0.0
    %95 = vmatprep.subr.mxu0 0.0
    %96 = vmatpush1.msra.mxu0 0.0
    %97 = vmatprep.subr.mxu0 0.0
    %98 = vmatpush1.msra.mxu0 0.0
    %99 = vmatprep.subr.mxu0 0.0
    %100 = vmatpush1.msra.mxu0 0.0
    %101 = vmatprep.subr.mxu0 0.0
    %102 = vmatpush1.msra.mxu0 0.0
    %103 = vmatprep.subr.mxu0 0.0
    %104 = vmatpush1.msra.mxu0 %v67
    %105 = vmatprep.subr.mxu0 0.0
    %106 = vmatpush1.msra.mxu0 %v66
    %107 = vmatprep.subr.mxu0 0.0
    %108 = vmatpush1.msra.mxu0 %v65
    %109 = vmatprep.subr.mxu0 0.0
    %110 = vmatpush1.msra.mxu0 %v64
    %111 = vmatprep.subr.mxu0 0.0
    %112 = vmatpush2.msra.mxu0 0.0
    %113 = vmatprep.subr.mxu0 0.0
    %114 = vmatpush2.msra.mxu0 0.0
    %115 = vmatprep.subr.mxu0 0.0
    %116 = vmatpush2.msra.mxu0 0.0
    %117 = vmatprep.subr.mxu0 0.0
    %118 = vmatpush2.msra.mxu0 0.0
    %119 = vmatprep.subr.mxu0 0.0
    %120 = vmatpush2.msra.mxu0 0.0
    %121 = vmatprep.subr.mxu0 0.0
    %122 = vmatpush2.msra.mxu0 0.0
    %123 = vmatprep.subr.mxu0 0.0
    %124 = vmatpush2.msra.mxu0 0.0
    %125 = vmatprep.subr.mxu0 0.0
    %126 = vmatpush2.msra.mxu0 0.0
    %127 = vmatprep.subr.mxu0 0.0
    %128 = vmatpush2.msra.mxu0 0.0
    %129 = vmatprep.subr.mxu0 0.0
    %130 = vmatpush2.msra.mxu0 0.0
    %131 = vmatprep.subr.mxu0 0.0
    %132 = vmatpush2.msra.mxu0 0.0
    %133 = vmatprep.subr.mxu0 0.0
    %134 = vmatpush2.msra.mxu0 0.0
    %135 = vmatprep.subr.mxu0 0.0
    %136 = vmatpush2.msra.mxu0 0.0
    %137 = vmatprep.subr.mxu0 0.0
    %138 = vmatpush2.msra.mxu0 0.0
    %139 = vmatprep.subr.mxu0 0.0
    %140 = vmatpush2.msra.mxu0 0.0
    %141 = vmatprep.subr.mxu0 0.0
    %142 = vmatpush2.msra.mxu0 0.0
    %143 = vmatprep.mubr.f32.mxu0 0.0
    %144 = vmatmul.mubr.f32.gmra.mxu0 %v77
    %v145 = vpop.f32.mrf.mxu0
    %v146 = vadd.f32 %v73, %v145
    %v147 = vpop.f32.mrf.mxu0
    %148 = vdwg.mxu0
    %v149 = vld [vmem:[#allocation7] sm:$0xff]
    %v150 = vld [vmem:[#allocation7 + $0x8] sm:$0xff]
    %v151 = vld [vmem:[#allocation7 + $0x10] sm:$0xff]
    %v152 = vld [vmem:[#allocation7 + $0x18] sm:$0xff]
    %v153 = vld [vmem:[%s4] sm:$0x1]
    %v155 = vlaneseq
    %v156 = vshrl.u32 %v155, 7
    %v157 = vsub.s32 0, %v156
    %v158 = vrot.slane %v153, %v157
    %160 = vmatprep.subr.mxu0 0.0
    %161 = vmatpush1.msra.mxu0 0.0
    %162 = vmatprep.subr.mxu0 0.0
    %163 = vmatpush1.msra.mxu0 0.0
    %164 = vmatprep.subr.mxu0 0.0
    %165 = vmatpush1.msra.mxu0 0.0
    %166 = vmatprep.subr.mxu0 0.0
    %167 = vmatpush1.msra.mxu0 0.0
    %168 = vmatprep.subr.mxu0 0.0
    %169 = vmatpush1.msra.mxu0 0.0
    %170 = vmatprep.subr.mxu0 0.0
    %171 = vmatpush1.msra.mxu0 0.0
    %172 = vmatprep.subr.mxu0 0.0
    %173 = vmatpush1.msra.mxu0 0.0
    %174 = vmatprep.subr.mxu0 0.0
    %175 = vmatpush1.msra.mxu0 0.0
    %176 = vmatprep.subr.mxu0 0.0
    %177 = vmatpush1.msra.mxu0 0.0
    %178 = vmatprep.subr.mxu0 0.0
    %179 = vmatpush1.msra.mxu0 0.0
    %180 = vmatprep.subr.mxu0 0.0
    %181 = vmatpush1.msra.mxu0 0.0
    %182 = vmatprep.subr.mxu0 0.0
    %183 = vmatpush1.msra.mxu0 0.0
    %184 = vmatprep.subr.mxu0 0.0
    %185 = vmatpush1.msra.mxu0 %v152
    %186 = vmatprep.subr.mxu0 0.0
    %187 = vmatpush1.msra.mxu0 %v151
    %188 = vmatprep.subr.mxu0 0.0
    %189 = vmatpush1.msra.mxu0 %v150
    %190 = vmatprep.subr.mxu0 0.0
    %191 = vmatpush1.msra.mxu0 %v149
    %192 = vmatprep.subr.mxu0 0.0
    %193 = vmatpush2.msra.mxu0 0.0
    %194 = vmatprep.subr.mxu0 0.0
    %195 = vmatpush2.msra.mxu0 0.0
    %196 = vmatprep.subr.mxu0 0.0
    %197 = vmatpush2.msra.mxu0 0.0
    %198 = vmatprep.subr.mxu0 0.0
    %199 = vmatpush2.msra.mxu0 0.0
    %200 = vmatprep.subr.mxu0 0.0
    %201 = vmatpush2.msra.mxu0 0.0
    %202 = vmatprep.subr.mxu0 0.0
    %203 = vmatpush2.msra.mxu0 0.0
    %204 = vmatprep.subr.mxu0 0.0
    %205 = vmatpush2.msra.mxu0 0.0
    %206 = vmatprep.subr.mxu0 0.0
    %207 = vmatpush2.msra.mxu0 0.0
    %208 = vmatprep.subr.mxu0 0.0
    %209 = vmatpush2.msra.mxu0 0.0
    %210 = vmatprep.subr.mxu0 0.0
    %211 = vmatpush2.msra.mxu0 0.0
    %212 = vmatprep.subr.mxu0 0.0
    %213 = vmatpush2.msra.mxu0 0.0
    %214 = vmatprep.subr.mxu0 0.0
    %215 = vmatpush2.msra.mxu0 0.0
    %216 = vmatprep.subr.mxu0 0.0
    %217 = vmatpush2.msra.mxu0 0.0
    %218 = vmatprep.subr.mxu0 0.0
    %219 = vmatpush2.msra.mxu0 0.0
    %220 = vmatprep.subr.mxu0 0.0
    %221 = vmatpush2.msra.mxu0 0.0
    %222 = vmatprep.subr.mxu0 0.0
    %223 = vmatpush2.msra.mxu0 0.0
    %224 = vmatprep.mubr.f32.mxu0 0.0
    %225 = vmatmul.mubr.f32.gmra.mxu0 %v77
    %v226 = vpop.f32.mrf.mxu0
    %v227 = vadd.f32 %v158, %v226
    %v228 = vpop.f32.mrf.mxu0
    %229 = vdwg.mxu0
    %vm230 = vcmp.gt.f32.partialorder %v146, 0.0
    %v231 = vmul.f32 %v146, 0.01
    %v232 = vsel %vm230, %v146, %v231
    %vm233 = vcmask 523264
    %234 = vst.msk [vmem:[#allocation8] sm:$0xff] %vm233, %v232
    %vm235 = vcmp.gt.f32.partialorder %v227, 0.0
    %v236 = vmul.f32 %v227, 0.01
    %v237 = vsel %vm235, %v227, %v236
    %238 = vst.msk [vmem:[#allocation9] sm:$0xff] %vm233, %v237
    // Predicated region
    $region34: #{tpu_custom_call.1} parent=1 // pred_check
      _
    $region35: #{tpu_custom_call.1} parent=1 // pred_check_branch
      %240 = sbr.rel (0) target = $region37
    $region36: #{tpu_custom_call.1} parent=1 // pred_region
      %s242 = ssub.s32 128, 128
      %243 = vsyncadd [#allocation4], %s242
      %s245 = sshll.u32 [#allocation8], 4
      %s246 = int_to_ptr.vmem [resolvable:$true] %s245
      %248 = dma.vmem_to_hbm [thread:$0]  %s246, 128, %s5, [#allocation4]
    $region37: #{tpu_custom_call.1} parent=1 // pred_fallthru
      _
    // Predicated region
    $region38: #{tpu_custom_call.1} parent=1 // pred_check
      _
    $region39: #{tpu_custom_call.1} parent=1 // pred_check_branch
      %250 = sbr.rel (0) target = $region41
    $region40: #{tpu_custom_call.1} parent=1 // pred_region
      %s252 = ssub.s32 128, 128
      %253 = vsyncadd [#allocation10], %s252
      %s255 = sshll.u32 [#allocation9], 4
      %s256 = int_to_ptr.vmem [resolvable:$true] %s255
      %258 = dma.vmem_to_hbm [thread:$0]  %s256, 128, %s6, [#allocation10]
    $region41: #{tpu_custom_call.1} parent=1 // pred_fallthru
      _
    // Predicated region
    $region42: #{tpu_custom_call.1} parent=1 // pred_check
      _
    $region43: #{tpu_custom_call.1} parent=1 // pred_check_branch
      %260 = sbr.rel (0) target = $region45
    $region44: #{tpu_custom_call.1} parent=1 // pred_region
      %261 = dma.done [#allocation4], 128
    $region45: #{tpu_custom_call.1} parent=1 // pred_fallthru
      _
    // Predicated region
    $region46: #{tpu_custom_call.1} parent=1 // pred_check
      _
    $region47: #{tpu_custom_call.1} parent=1 // pred_check_branch
      %263 = sbr.rel (0) target = $region49
    $region48: #{tpu_custom_call.1} parent=1 // pred_region
      %264 = dma.done [#allocation10], 128
    $region49: #{tpu_custom_call.1} parent=1 // pred_fallthru
      _
    %265 = vsyncpa [#allocation3], 1
    %266 = vsyncpa [#allocation6], 1
    %267 = vsyncpa [#allocation4], 1
    %268 = vsyncpa [#allocation10], 1

</llo_original>
